<compile_context>
chip_gen: v6e
topology: v6e:2x2x1
jax: 0.10.0
libtpu: 0.0.40
codegen_flags: <defaults>
</compile_context>

<pallas_src>
import numpy as np
import jax
import jax.numpy as jnp
from jax import lax
from jax.experimental import pallas as pl
from jax.experimental.pallas import tpu as pltpu

K = 3        # conv kernel size
STRIDE = 2
PAD = 1
BB_CAP = 256  # per-grid-step batch chunk (VMEM-aware cap, see header)


def _conv_out_len(l_in):
    return (l_in + 2 * PAD - K) // STRIDE + 1


def _pad_rows(l_in):
    # scratch rows: l_in interior rows + one zero row on each side, sublane-rounded
    return ((l_in + 2 + 7) // 8) * 8


def _make_kernel(L1, L2, L3):
    def kernel(xcol_ref,
               w1_ref, b1_ref, w2_ref, b2_ref, w3_ref, b3_ref,
               o_ref,
               pad2_ref, pad3_ref):
        BB = xcol_ref.shape[0]

        # Zero pad scratches ONCE per grid step (not per sample / per layer).
        # Only row 0 and rows >= l_in+1 actually need to stay zero (they
        # reproduce Conv1d's zero padding); interior rows are overwritten below.
        pad2_ref[...] = jnp.zeros_like(pad2_ref)
        pad3_ref[...] = jnp.zeros_like(pad3_ref)

        # ---- layer 1: input arrives pre-im2col'd as (BB, L1, K*C_in) -> one dot.
        col1 = xcol_ref[...].reshape(BB * L1, -1).astype(jnp.bfloat16)
        h1 = jnp.maximum(
            jnp.dot(col1, w1_ref[...], preferred_element_type=jnp.float32)
            + b1_ref[...],
            0.0)                                               # (BB*L1, H) f32

        # ---- layers 2 & 3: batched strided-tap gather from a zero-padded VMEM
        #      scratch; K accumulating dots (no lane-axis concat).
        def conv_layer(h2d, l_in, l_out, pad_ref, w_ref, b_ref):
            c_in = h2d.shape[-1]
            pad_ref[:, pl.ds(1, l_in), :] = h2d.reshape(BB, l_in, c_in)
            acc = b_ref[...]                                   # (1, C_out) f32
            for k in range(K):                                 # K = 3 static taps
                # tap k of output t reads padded row 2*t + k (input row 2*t+k-1)
                tap = pad_ref[:, pl.ds(k, l_out, stride=STRIDE), :]
                tap2d = tap.reshape(BB * l_out, c_in).astype(jnp.bfloat16)
                acc = acc + jnp.dot(tap2d, w_ref[k],
                                    preferred_element_type=jnp.float32)
            return jnp.maximum(acc, 0.0)                       # (BB*l_out, C_out)

        h2 = conv_layer(h1, L1, L2, pad2_ref, w2_ref, b2_ref)  # (BB*L2, H)
        h3 = conv_layer(h2, L2, L3, pad3_ref, w3_ref, b3_ref)  # (BB*L3, C_out), 1/L3 folded

        # mean over length == row-sum (1/L3 folded into W3/b3); one slab store.
        o_ref[...] = jnp.sum(h3.reshape(BB, L3, -1), axis=1).astype(o_ref.dtype)

    return kernel


def nspt_extractor(x_ncl, w1, b1, w2, b2, w3, b3, *, bb_cap=BB_CAP):
    """x_ncl: (B, C_in, L) f32; weights in PyTorch Conv1d layout (C_out, C_in, K)."""
    B, C_in, L = x_ncl.shape
    H = w1.shape[0]
    C_out = w3.shape[0]

    L1 = _conv_out_len(L)
    L2 = _conv_out_len(L1)
    L3 = _conv_out_len(L2)

    # Channels-last + zero pad along length, then wrapper-side im2col for layer 1.
    x_blc = jnp.transpose(x_ncl, (0, 2, 1)).astype(jnp.float32)      # (B, L, C_in)
    x_pad = jnp.pad(x_blc, ((0, 0), (PAD, PAD), (0, 0)))             # (B, L+2, C_in)
    x_col = jnp.concatenate(
        [x_pad[:, k::STRIDE, :][:, :L1, :] for k in range(K)], axis=-1)  # (B, L1, K*C_in)

    # Batch tiling (VMEM-aware): one step when the batch fits, otherwise
    # ceil(B / bb_cap) parallel steps of bb_cap samples (zero-padded tail).
    BB = min(B, bb_cap)
    num_steps = pl.cdiv(B, BB)
    B_pad = num_steps * BB
    if B_pad != B:
        x_col = jnp.pad(x_col, ((0, B_pad - B), (0, 0), (0, 0)))

    # Weights: layer 1 as one merged (K*C_in, H) im2col matrix; layers 2/3 as K
    # separate per-tap (C_in, C_out) slabs; 1/L3 mean folded into layer 3.
    W1 = jnp.transpose(w1, (2, 1, 0)).reshape(K * C_in, H).astype(jnp.bfloat16)
    W2 = jnp.transpose(w2, (2, 1, 0)).astype(jnp.bfloat16)           # (K, H, H)
    W3 = (jnp.transpose(w3, (2, 1, 0)) / L3).astype(jnp.bfloat16)    # (K, H, C_out)
    B1 = b1.reshape(1, -1).astype(jnp.float32)
    B2 = b2.reshape(1, -1).astype(jnp.float32)
    B3 = (b3 / L3).reshape(1, -1).astype(jnp.float32)

    def full_spec(a):
        nd = a.ndim
        return pl.BlockSpec(a.shape, lambda s, _nd=nd: (0,) * _nd)

    out = pl.pallas_call(
        _make_kernel(L1, L2, L3),
        out_shape=jax.ShapeDtypeStruct((B_pad, C_out), jnp.float32),
        grid=(num_steps,),
        in_specs=[
            pl.BlockSpec((BB, L1, K * C_in), lambda s: (s, 0, 0)),
            full_spec(W1), full_spec(B1),
            full_spec(W2), full_spec(B2),
            full_spec(W3), full_spec(B3),
        ],
        out_specs=pl.BlockSpec((BB, C_out), lambda s: (s, 0)),
        scratch_shapes=[
            pltpu.VMEM((BB, _pad_rows(L1), H), jnp.float32),
            pltpu.VMEM((BB, _pad_rows(L2), H), jnp.float32),
        ],
        compiler_params=pltpu.CompilerParams(
            dimension_semantics=("parallel",)),
    )(x_col, W1, B1, W2, B2, W3, B3)

    return out[:B]


def reference_forward(x_ncl, w1, b1, w2, b2, w3, b3):
    """Pure-JAX f32 reference matching PyTorch Conv1d semantics exactly."""
    def conv(h, w, b):
        y = lax.conv_general_dilated(h, w, window_strides=(STRIDE,),
                                     padding=[(PAD, PAD)],
                                     dimension_numbers=('NCH', 'OIH', 'NCH'))
        return jnp.maximum(y + b[None, :, None], 0.0)
    h = conv(x_ncl, w1, b1)
    h = conv(h, w2, b2)
    h = conv(h, w3, b3)
    return jnp.mean(h, axis=2)


if __name__ == "__main__":
    in_feature, hidden_dim, out_feature = 3, 8, 16
    B, L = 2, 16

    key = jax.random.PRNGKey(0)
    k_x, k1, k2, k3, k4, k5, k6 = jax.random.split(key, 7)

    x = jax.random.normal(k_x, (B, in_feature, L), dtype=jnp.float32)

    # Deterministic synthetic parameters (PyTorch Conv1d layout: (C_out, C_in, K)).
    w1 = 0.2 * jax.random.normal(k1, (hidden_dim, in_feature, K), dtype=jnp.float32)
    b1 = 0.1 * jax.random.normal(k2, (hidden_dim,), dtype=jnp.float32)
    w2 = 0.2 * jax.random.normal(k3, (hidden_dim, hidden_dim, K), dtype=jnp.float32)
    b2 = 0.1 * jax.random.normal(k4, (hidden_dim,), dtype=jnp.float32)
    w3 = 0.2 * jax.random.normal(k5, (out_feature, hidden_dim, K), dtype=jnp.float32)
    b3 = 0.1 * jax.random.normal(k6, (out_feature,), dtype=jnp.float32)

    y = nspt_extractor(x, w1, b1, w2, b2, w3, b3)
    y = jax.block_until_ready(y)

    y_ref = reference_forward(x, w1, b1, w2, b2, w3, b3)
    assert y.shape == (B, out_feature)
    # bf16 weights/activations in the matmuls -> loosened tolerance vs f32 reference.
    np.testing.assert_allclose(np.asarray(y), np.asarray(y_ref), rtol=5e-2, atol=3e-2)

    print("KERNEL_OK")
</pallas_src>

<mosaic_0001>
module attributes {stable_mosaic.version = 11 : i64} {
  func.func @kernel(%arg0: i32, %arg1: memref<2x8x9xf32, #tpu.memory_space<vmem>>, %arg2: memref<9x8xbf16, #tpu.memory_space<vmem>>, %arg3: memref<1x8xf32, #tpu.memory_space<vmem>>, %arg4: memref<3x8x8xbf16, #tpu.memory_space<vmem>>, %arg5: memref<1x8xf32, #tpu.memory_space<vmem>>, %arg6: memref<3x8x16xbf16, #tpu.memory_space<vmem>>, %arg7: memref<1x16xf32, #tpu.memory_space<vmem>>, %arg8: memref<2x16xf32, #tpu.memory_space<vmem>>, %arg9: memref<2x16x8xf32, #tpu.memory_space<vmem>>, %arg10: memref<2x8x8xf32, #tpu.memory_space<vmem>>) attributes {dimension_semantics = [#tpu.dimension_semantics<parallel>], iteration_bounds = array<i64: 1>, scalar_prefetch = 0 : i64, scratch_operands = 2 : i64, tpu.core_type = #tpu.core_type<tc>, window_params = [{transform_indices = @transform_0, window_bounds = array<i64: 2, 8, 9>}, {pipeline_mode = #tpu.pipeline_mode<synchronous>, transform_indices = @transform_1, window_bounds = array<i64: 9, 8>}, {pipeline_mode = #tpu.pipeline_mode<synchronous>, transform_indices = @transform_2, window_bounds = array<i64: 1, 8>}, {pipeline_mode = #tpu.pipeline_mode<synchronous>, transform_indices = @transform_3, window_bounds = array<i64: 3, 8, 8>}, {pipeline_mode = #tpu.pipeline_mode<synchronous>, transform_indices = @transform_4, window_bounds = array<i64: 1, 8>}, {pipeline_mode = #tpu.pipeline_mode<synchronous>, transform_indices = @transform_5, window_bounds = array<i64: 3, 8, 16>}, {pipeline_mode = #tpu.pipeline_mode<synchronous>, transform_indices = @transform_6, window_bounds = array<i64: 1, 16>}, {transform_indices = @transform_7, window_bounds = array<i64: 2, 16>}]} {
    %cst = arith.constant 0.000000e+00 : f32
    %0 = vector.broadcast %cst : f32 to vector<2x16x8xf32>
    %c0 = arith.constant 0 : index
    %c0_0 = arith.constant 0 : index
    %c0_1 = arith.constant 0 : index
    %1 = vector.load %arg9[%c0, %c0_0, %c0_1] : memref<2x16x8xf32, #tpu.memory_space<vmem>>, vector<2x16x8xf32>
    tpu.vector_store %arg9[%c0, %c0_0, %c0_1], %0 {strides = array<i32>} : memref<2x16x8xf32, #tpu.memory_space<vmem>>, vector<2x16x8xf32>,
    %cst_2 = arith.constant 0.000000e+00 : f32
    %2 = vector.broadcast %cst_2 : f32 to vector<2x8x8xf32>
    %c0_3 = arith.constant 0 : index
    %c0_4 = arith.constant 0 : index
    %c0_5 = arith.constant 0 : index
    %3 = vector.load %arg10[%c0_3, %c0_4, %c0_5] : memref<2x8x8xf32, #tpu.memory_space<vmem>>, vector<2x8x8xf32>
    tpu.vector_store %arg10[%c0_3, %c0_4, %c0_5], %2 {strides = array<i32>} : memref<2x8x8xf32, #tpu.memory_space<vmem>>, vector<2x8x8xf32>,
    %c0_6 = arith.constant 0 : index
    %c0_7 = arith.constant 0 : index
    %c0_8 = arith.constant 0 : index
    %4 = vector.load %arg1[%c0_6, %c0_7, %c0_8] : memref<2x8x9xf32, #tpu.memory_space<vmem>>, vector<2x8x9xf32>
    %5 = vector.shape_cast %4 : vector<2x8x9xf32> to vector<16x9xf32>
    %6 = arith.truncf %5 : vector<16x9xf32> to vector<16x9xbf16>
    %c0_9 = arith.constant 0 : index
    %c0_10 = arith.constant 0 : index
    %7 = vector.load %arg2[%c0_9, %c0_10] : memref<9x8xbf16, #tpu.memory_space<vmem>>, vector<9x8xbf16>
    %cst_11 = arith.constant dense<0.000000e+00> : vector<16x8xf32>
    %8 = tpu.matmul %6, %7, %cst_11 {dimension_numbers = #tpu.dot_dimension_numbers<[1], [0], [0], [1], [0, 0, 1, 1], [], []>} : vector<16x9xbf16>, vector<9x8xbf16>, vector<16x8xf32> -> vector<16x8xf32>
    %c0_12 = arith.constant 0 : index
    %c0_13 = arith.constant 0 : index
    %9 = vector.load %arg3[%c0_12, %c0_13] : memref<1x8xf32, #tpu.memory_space<vmem>>, vector<1x8xf32>
    %10 = vector.broadcast %9 : vector<1x8xf32> to vector<16x8xf32>
    %11 = arith.addf %8, %10 : vector<16x8xf32>
    %cst_14 = arith.constant 0.000000e+00 : f32
    %12 = vector.broadcast %cst_14 : f32 to vector<16x8xf32>
    %13 = arith.maximumf %11, %12 : vector<16x8xf32>
    %14 = vector.shape_cast %13 : vector<16x8xf32> to vector<2x8x8xf32>
    %c0_15 = arith.constant 0 : index
    %c1 = arith.constant 1 : index
    %c0_16 = arith.constant 0 : index
    %15 = vector.load %arg9[%c0_15, %c1, %c0_16] : memref<2x16x8xf32, #tpu.memory_space<vmem>>, vector<2x8x8xf32>
    tpu.vector_store %arg9[%c0_15, %c1, %c0_16], %14 {strides = array<i32>} : memref<2x16x8xf32, #tpu.memory_space<vmem>>, vector<2x8x8xf32>,
    %c0_17 = arith.constant 0 : index
    %c0_18 = arith.constant 0 : index
    %16 = vector.load %arg5[%c0_17, %c0_18] : memref<1x8xf32, #tpu.memory_space<vmem>>, vector<1x8xf32>
    %c0_19 = arith.constant 0 : index
    %c0_20 = arith.constant 0 : index
    %c0_21 = arith.constant 0 : index
    %17 = tpu.strided_load %arg9[%c0_19, %c0_20, %c0_21] {strides = array<i32: 1, 2, 1>} : memref<2x16x8xf32, #tpu.memory_space<vmem>>, vector<2x4x8xf32>
    %18 = vector.shape_cast %17 : vector<2x4x8xf32> to vector<8x8xf32>
    %19 = arith.truncf %18 : vector<8x8xf32> to vector<8x8xbf16>
    %c0_22 = arith.constant 0 : index
    %c0_23 = arith.constant 0 : index
    %c0_24 = arith.constant 0 : index
    %20 = vector.load %arg4[%c0_22, %c0_23, %c0_24] : memref<3x8x8xbf16, #tpu.memory_space<vmem>>, vector<1x8x8xbf16>
    %21 = vector.shape_cast %20 : vector<1x8x8xbf16> to vector<8x8xbf16>
    %cst_25 = arith.constant dense<0.000000e+00> : vector<8x8xf32>
    %22 = tpu.matmul %19, %21, %cst_25 {dimension_numbers = #tpu.dot_dimension_numbers<[1], [0], [0], [1], [0, 0, 1, 1], [], []>} : vector<8x8xbf16>, vector<8x8xbf16>, vector<8x8xf32> -> vector<8x8xf32>
    %23 = vector.broadcast %16 : vector<1x8xf32> to vector<8x8xf32>
    %24 = arith.addf %23, %22 : vector<8x8xf32>
    %c0_26 = arith.constant 0 : index
    %c1_27 = arith.constant 1 : index
    %c0_28 = arith.constant 0 : index
    %25 = tpu.strided_load %arg9[%c0_26, %c1_27, %c0_28] {strides = array<i32: 1, 2, 1>} : memref<2x16x8xf32, #tpu.memory_space<vmem>>, vector<2x4x8xf32>
    %26 = vector.shape_cast %25 : vector<2x4x8xf32> to vector<8x8xf32>
    %27 = arith.truncf %26 : vector<8x8xf32> to vector<8x8xbf16>
    %c1_29 = arith.constant 1 : index
    %c0_30 = arith.constant 0 : index
    %c0_31 = arith.constant 0 : index
    %28 = vector.load %arg4[%c1_29, %c0_30, %c0_31] : memref<3x8x8xbf16, #tpu.memory_space<vmem>>, vector<1x8x8xbf16>
    %29 = vector.shape_cast %28 : vector<1x8x8xbf16> to vector<8x8xbf16>
    %cst_32 = arith.constant dense<0.000000e+00> : vector<8x8xf32>
    %30 = tpu.matmul %27, %29, %cst_32 {dimension_numbers = #tpu.dot_dimension_numbers<[1], [0], [0], [1], [0, 0, 1, 1], [], []>} : vector<8x8xbf16>, vector<8x8xbf16>, vector<8x8xf32> -> vector<8x8xf32>
    %31 = arith.addf %24, %30 : vector<8x8xf32>
    %c0_33 = arith.constant 0 : index
    %c2 = arith.constant 2 : index
    %c0_34 = arith.constant 0 : index
    %32 = tpu.strided_load %arg9[%c0_33, %c2, %c0_34] {strides = array<i32: 1, 2, 1>} : memref<2x16x8xf32, #tpu.memory_space<vmem>>, vector<2x4x8xf32>
    %33 = vector.shape_cast %32 : vector<2x4x8xf32> to vector<8x8xf32>
    %34 = arith.truncf %33 : vector<8x8xf32> to vector<8x8xbf16>
    %c2_35 = arith.constant 2 : index
    %c0_36 = arith.constant 0 : index
    %c0_37 = arith.constant 0 : index
    %35 = vector.load %arg4[%c2_35, %c0_36, %c0_37] : memref<3x8x8xbf16, #tpu.memory_space<vmem>>, vector<1x8x8xbf16>
    %36 = vector.shape_cast %35 : vector<1x8x8xbf16> to vector<8x8xbf16>
    %cst_38 = arith.constant dense<0.000000e+00> : vector<8x8xf32>
    %37 = tpu.matmul %34, %36, %cst_38 {dimension_numbers = #tpu.dot_dimension_numbers<[1], [0], [0], [1], [0, 0, 1, 1], [], []>} : vector<8x8xbf16>, vector<8x8xbf16>, vector<8x8xf32> -> vector<8x8xf32>
    %38 = arith.addf %31, %37 : vector<8x8xf32>
    %cst_39 = arith.constant 0.000000e+00 : f32
    %39 = vector.broadcast %cst_39 : f32 to vector<8x8xf32>
    %40 = arith.maximumf %38, %39 : vector<8x8xf32>
    %41 = vector.shape_cast %40 : vector<8x8xf32> to vector<2x4x8xf32>
    %c0_40 = arith.constant 0 : index
    %c1_41 = arith.constant 1 : index
    %c0_42 = arith.constant 0 : index
    %42 = vector.load %arg10[%c0_40, %c1_41, %c0_42] : memref<2x8x8xf32, #tpu.memory_space<vmem>>, vector<2x4x8xf32>
    tpu.vector_store %arg10[%c0_40, %c1_41, %c0_42], %41 {strides = array<i32>} : memref<2x8x8xf32, #tpu.memory_space<vmem>>, vector<2x4x8xf32>,
    %c0_43 = arith.constant 0 : index
    %c0_44 = arith.constant 0 : index
    %43 = vector.load %arg7[%c0_43, %c0_44] : memref<1x16xf32, #tpu.memory_space<vmem>>, vector<1x16xf32>
    %c0_45 = arith.constant 0 : index
    %c0_46 = arith.constant 0 : index
    %c0_47 = arith.constant 0 : index
    %44 = tpu.strided_load %arg10[%c0_45, %c0_46, %c0_47] {strides = array<i32: 1, 2, 1>} : memref<2x8x8xf32, #tpu.memory_space<vmem>>, vector<2x2x8xf32>
    %45 = vector.shape_cast %44 : vector<2x2x8xf32> to vector<4x8xf32>
    %46 = arith.truncf %45 : vector<4x8xf32> to vector<4x8xbf16>
    %c0_48 = arith.constant 0 : index
    %c0_49 = arith.constant 0 : index
    %c0_50 = arith.constant 0 : index
    %47 = vector.load %arg6[%c0_48, %c0_49, %c0_50] : memref<3x8x16xbf16, #tpu.memory_space<vmem>>, vector<1x8x16xbf16>
    %48 = vector.shape_cast %47 : vector<1x8x16xbf16> to vector<8x16xbf16>
    %cst_51 = arith.constant dense<0.000000e+00> : vector<4x16xf32>
    %49 = tpu.matmul %46, %48, %cst_51 {dimension_numbers = #tpu.dot_dimension_numbers<[1], [0], [0], [1], [0, 0, 1, 1], [], []>} : vector<4x8xbf16>, vector<8x16xbf16>, vector<4x16xf32> -> vector<4x16xf32>
    %50 = vector.broadcast %43 : vector<1x16xf32> to vector<4x16xf32>
    %51 = arith.addf %50, %49 : vector<4x16xf32>
    %c0_52 = arith.constant 0 : index
    %c1_53 = arith.constant 1 : index
    %c0_54 = arith.constant 0 : index
    %52 = tpu.strided_load %arg10[%c0_52, %c1_53, %c0_54] {strides = array<i32: 1, 2, 1>} : memref<2x8x8xf32, #tpu.memory_space<vmem>>, vector<2x2x8xf32>
    %53 = vector.shape_cast %52 : vector<2x2x8xf32> to vector<4x8xf32>
    %54 = arith.truncf %53 : vector<4x8xf32> to vector<4x8xbf16>
    %c1_55 = arith.constant 1 : index
    %c0_56 = arith.constant 0 : index
    %c0_57 = arith.constant 0 : index
    %55 = vector.load %arg6[%c1_55, %c0_56, %c0_57] : memref<3x8x16xbf16, #tpu.memory_space<vmem>>, vector<1x8x16xbf16>
    %56 = vector.shape_cast %55 : vector<1x8x16xbf16> to vector<8x16xbf16>
    %cst_58 = arith.constant dense<0.000000e+00> : vector<4x16xf32>
    %57 = tpu.matmul %54, %56, %cst_58 {dimension_numbers = #tpu.dot_dimension_numbers<[1], [0], [0], [1], [0, 0, 1, 1], [], []>} : vector<4x8xbf16>, vector<8x16xbf16>, vector<4x16xf32> -> vector<4x16xf32>
    %58 = arith.addf %51, %57 : vector<4x16xf32>
    %c0_59 = arith.constant 0 : index
    %c2_60 = arith.constant 2 : index
    %c0_61 = arith.constant 0 : index
    %59 = tpu.strided_load %arg10[%c0_59, %c2_60, %c0_61] {strides = array<i32: 1, 2, 1>} : memref<2x8x8xf32, #tpu.memory_space<vmem>>, vector<2x2x8xf32>
    %60 = vector.shape_cast %59 : vector<2x2x8xf32> to vector<4x8xf32>
    %61 = arith.truncf %60 : vector<4x8xf32> to vector<4x8xbf16>
    %c2_62 = arith.constant 2 : index
    %c0_63 = arith.constant 0 : index
    %c0_64 = arith.constant 0 : index
    %62 = vector.load %arg6[%c2_62, %c0_63, %c0_64] : memref<3x8x16xbf16, #tpu.memory_space<vmem>>, vector<1x8x16xbf16>
    %63 = vector.shape_cast %62 : vector<1x8x16xbf16> to vector<8x16xbf16>
    %cst_65 = arith.constant dense<0.000000e+00> : vector<4x16xf32>
    %64 = tpu.matmul %61, %63, %cst_65 {dimension_numbers = #tpu.dot_dimension_numbers<[1], [0], [0], [1], [0, 0, 1, 1], [], []>} : vector<4x8xbf16>, vector<8x16xbf16>, vector<4x16xf32> -> vector<4x16xf32>
    %65 = arith.addf %58, %64 : vector<4x16xf32>
    %cst_66 = arith.constant 0.000000e+00 : f32
    %66 = vector.broadcast %cst_66 : f32 to vector<4x16xf32>
    %67 = arith.maximumf %65, %66 : vector<4x16xf32>
    %68 = vector.shape_cast %67 : vector<4x16xf32> to vector<2x2x16xf32>
    %cst_67 = arith.constant dense<0.000000e+00> : vector<2x16xf32>
    %69 = vector.multi_reduction <add>, %68, %cst_67 [1] : vector<2x2x16xf32> to vector<2x16xf32>
    %c0_68 = arith.constant 0 : index
    %c0_69 = arith.constant 0 : index
    %70 = vector.load %arg8[%c0_68, %c0_69] : memref<2x16xf32, #tpu.memory_space<vmem>>, vector<2x16xf32>
    tpu.vector_store %arg8[%c0_68, %c0_69], %69 {strides = array<i32>} : memref<2x16xf32, #tpu.memory_space<vmem>>, vector<2x16xf32>,
    return
  }
  func.func @transform_0(%arg0: i32) -> (i32, i32, i32) {
    %c0_i32 = arith.constant 0 : i32
    %c0_i32_0 = arith.constant 0 : i32
    %c0_i32_1 = arith.constant 0 : i32
    return %arg0, %c0_i32, %c0_i32_0 : i32, i32, i32
  }
  func.func @transform_1(%arg0: i32) -> (i32, i32) {
    %c0_i32 = arith.constant 0 : i32
    %c0_i32_0 = arith.constant 0 : i32
    %c0_i32_1 = arith.constant 0 : i32
    return %c0_i32, %c0_i32_0 : i32, i32
  }
  func.func @transform_2(%arg0: i32) -> (i32, i32) {
    %c0_i32 = arith.constant 0 : i32
    %c0_i32_0 = arith.constant 0 : i32
    %c0_i32_1 = arith.constant 0 : i32
    return %c0_i32, %c0_i32_0 : i32, i32
  }
  func.func @transform_3(%arg0: i32) -> (i32, i32, i32) {
    %c0_i32 = arith.constant 0 : i32
    %c0_i32_0 = arith.constant 0 : i32
    %c0_i32_1 = arith.constant 0 : i32
    %c0_i32_2 = arith.constant 0 : i32
    return %c0_i32, %c0_i32_0, %c0_i32_1 : i32, i32, i32
  }
  func.func @transform_4(%arg0: i32) -> (i32, i32) {
    %c0_i32 = arith.constant 0 : i32
    %c0_i32_0 = arith.constant 0 : i32
    %c0_i32_1 = arith.constant 0 : i32
    return %c0_i32, %c0_i32_0 : i32, i32
  }
  func.func @transform_5(%arg0: i32) -> (i32, i32, i32) {
    %c0_i32 = arith.constant 0 : i32
    %c0_i32_0 = arith.constant 0 : i32
    %c0_i32_1 = arith.constant 0 : i32
    %c0_i32_2 = arith.constant 0 : i32
    return %c0_i32, %c0_i32_0, %c0_i32_1 : i32, i32, i32
  }
  func.func @transform_6(%arg0: i32) -> (i32, i32) {
    %c0_i32 = arith.constant 0 : i32
    %c0_i32_0 = arith.constant 0 : i32
    %c0_i32_1 = arith.constant 0 : i32
    return %c0_i32, %c0_i32_0 : i32, i32
  }
  func.func @transform_7(%arg0: i32) -> (i32, i32) {
    %c0_i32 = arith.constant 0 : i32
    %c0_i32_0 = arith.constant 0 : i32
    return %arg0, %c0_i32 : i32, i32
  }
}

</mosaic_0001>

<llo_original>
// kernel: tpu_custom_call.1
$region0: #{tpu_custom_call.1}
  #allocation0 [shape = 'u32[]', space=smem, size = 0x4, offset = 0x4, fixed_abs, tag = 'smem constant byte address 0x4 - core index']
  #allocation1 [shape = 'u32[144,128]{1,0:T(1,128)}', space=vmem, size = 0x12000, scoped, tag = 'internal scratch']
  #allocation2 [shape = 'f32[2,16,8]{2,1,0:T(8,128)}', space=vmem, size = 0x4000, scoped, tag = 'scratch operand']
  #allocation3 [shape = 'f32[2,8,8]{2,1,0:T(8,128)}', space=vmem, size = 0x2000, scoped, tag = 'scratch operand']
  %s0 = inlined_call_operand.hbm [shape: f32[2,8,9], index: 0, kind: input, shape index: {}]
  %s1 = inlined_call_operand.vmem [shape: bf16[9,8], index: 1, kind: input, shape index: {}]
  %s2 = inlined_call_operand.vmem [shape: f32[1,8], index: 2, kind: input, shape index: {}]
  %s3 = inlined_call_operand.vmem [shape: bf16[3,8,8], index: 3, kind: input, shape index: {}]
  %s4 = inlined_call_operand.vmem [shape: f32[1,8], index: 4, kind: input, shape index: {}]
  %s5 = inlined_call_operand.hbm [shape: bf16[3,8,16], index: 5, kind: input, shape index: {}]
  %s6 = inlined_call_operand.vmem [shape: f32[1,16], index: 6, kind: input, shape index: {}]
  %s7 = inlined_call_operand.hbm [shape: f32[2,16], index: 7, kind: output, shape index: {}]
  %s8 = sld [smem:[#allocation0]]
  $region46: #{tpu_custom_call.1} parent=0
    _
  %s10 = ssub.s32 1, %s8
  %s11 = scalar_select 0, %s10, %s8
  $region1: #{tpu_custom_call.1} parent=0
    #allocation4 [shape = 'u8[8192]{0}', space=vmem, size = 0x2000, scoped, tag = 'input window, operand 0, single buffered']
    #allocation5 [shape = 's32[1]{0}', space=sflag, size = 0x4, scoped, tag = 'scoped memory for tpu_custom_call.1']
    #allocation6 [shape = 's32[1]{0}', space=sflag, size = 0x4, scoped, tag = 'scoped memory for tpu_custom_call.1']
    #allocation7 [shape = 'u8[6144]{0}', space=vmem, size = 0x1800, scoped, tag = 'input window, operand 5, single buffered']
    #allocation8 [shape = 's32[1]{0}', space=sflag, size = 0x4, scoped, tag = 'scoped memory for tpu_custom_call.1']
    #allocation9 [shape = 'u8[1024]{0}', space=vmem, size = 0x400, scoped, tag = 'output window, operand 0, single buffered']
    %12 = vsyncpa [#allocation5], 0
    %13 = vsyncpa [#allocation8], 0
    %14 = vsyncpa [#allocation6], 0
    // Predicated region
    $region2: #{tpu_custom_call.1} parent=1 // pred_check
      _
    $region3: #{tpu_custom_call.1} parent=1 // pred_check_branch
      %16 = sbr.rel (0) target = $region5
    $region4: #{tpu_custom_call.1} parent=1 // pred_region
      %s18 = ssub.s32 256, 256
      %19 = vsyncadd [#allocation5], %s18
      %s20 = sshll.u32 [#allocation4], 4
      %s21 = int_to_ptr.vmem [resolvable:$true] %s20
      %26 = dma.hbm_to_vmem [thread:$0]  %s0, 256, %s21, [#allocation5], 128, 128, 8
    $region5: #{tpu_custom_call.1} parent=1 // pred_fallthru
      _
    // Predicated region
    $region6: #{tpu_custom_call.1} parent=1 // pred_check
      _
    $region7: #{tpu_custom_call.1} parent=1 // pred_check_branch
      %28 = sbr.rel (0) target = $region9
    $region8: #{tpu_custom_call.1} parent=1 // pred_region
      _
    $region9: #{tpu_custom_call.1} parent=1 // pred_fallthru
      _
    // Predicated region
    $region10: #{tpu_custom_call.1} parent=1 // pred_check
      _
    $region11: #{tpu_custom_call.1} parent=1 // pred_check_branch
      %30 = sbr.rel (0) target = $region13
    $region12: #{tpu_custom_call.1} parent=1 // pred_region
      _
    $region13: #{tpu_custom_call.1} parent=1 // pred_fallthru
      _
    // Predicated region
    $region14: #{tpu_custom_call.1} parent=1 // pred_check
      _
    $region15: #{tpu_custom_call.1} parent=1 // pred_check_branch
      %32 = sbr.rel (0) target = $region17
    $region16: #{tpu_custom_call.1} parent=1 // pred_region
      _
    $region17: #{tpu_custom_call.1} parent=1 // pred_fallthru
      _
    // Predicated region
    $region18: #{tpu_custom_call.1} parent=1 // pred_check
      _
    $region19: #{tpu_custom_call.1} parent=1 // pred_check_branch
      %34 = sbr.rel (0) target = $region21
    $region20: #{tpu_custom_call.1} parent=1 // pred_region
      _
    $region21: #{tpu_custom_call.1} parent=1 // pred_fallthru
      _
    // Predicated region
    $region22: #{tpu_custom_call.1} parent=1 // pred_check
      _
    $region23: #{tpu_custom_call.1} parent=1 // pred_check_branch
      %36 = sbr.rel (0) target = $region25
    $region24: #{tpu_custom_call.1} parent=1 // pred_region
      %s38 = ssub.s32 192, 192
      %39 = vsyncadd [#allocation8], %s38
      %s40 = sshll.u32 [#allocation7], 4
      %s41 = int_to_ptr.vmem [resolvable:$true] %s40
      %46 = dma.hbm_to_vmem [thread:$0]  %s5, 192, %s41, [#allocation8], 64, 64, 4
    $region25: #{tpu_custom_call.1} parent=1 // pred_fallthru
      _
    // Predicated region
    $region26: #{tpu_custom_call.1} parent=1 // pred_check
      _
    $region27: #{tpu_custom_call.1} parent=1 // pred_check_branch
      %48 = sbr.rel (0) target = $region29
    $region28: #{tpu_custom_call.1} parent=1 // pred_region
      _
    $region29: #{tpu_custom_call.1} parent=1 // pred_fallthru
      _
    // Predicated region
    $region30: #{tpu_custom_call.1} parent=1 // pred_check
      _
    $region31: #{tpu_custom_call.1} parent=1 // pred_check_branch
      %50 = sbr.rel (0) target = $region33
    $region32: #{tpu_custom_call.1} parent=1 // pred_region
      %51 = dma.done [#allocation5], 256
    $region33: #{tpu_custom_call.1} parent=1 // pred_fallthru
      _
    // Predicated region
    $region34: #{tpu_custom_call.1} parent=1 // pred_check
      _
    $region35: #{tpu_custom_call.1} parent=1 // pred_check_branch
      %53 = sbr.rel (0) target = $region37
    $region36: #{tpu_custom_call.1} parent=1 // pred_region
      %54 = dma.done [#allocation8], 192
    $region37: #{tpu_custom_call.1} parent=1 // pred_fallthru
      _
    %vm56 = vcmask 64512
    %57 = vst.msk [vmem:[#allocation2] sm:$0xff] %vm56, 0.0
    %58 = vst.msk [vmem:[#allocation2 + $0x8] sm:$0xff] %vm56, 0.0
    %59 = vst.msk [vmem:[#allocation2 + $0x10] sm:$0xff] %vm56, 0.0
    %60 = vst.msk [vmem:[#allocation2 + $0x18] sm:$0xff] %vm56, 0.0
    %61 = vst.msk [vmem:[#allocation3] sm:$0xff] %vm56, 0.0
    %62 = vst.msk [vmem:[#allocation3 + $0x8] sm:$0xff] %vm56, 0.0
    %v63 = vld [vmem:[#allocation4] sm:$0xff]
    %v64 = vld [vmem:[#allocation4 + $0x8] sm:$0xff]
    %v65 = vpack.c.bf16 %v64, %v63
    %v66 = vld [vmem:[%s1] sm:$0xf]
    %v67 = vld [vmem:[%s1 + $0x4] sm:$0x1]
    %v68 = vld [vmem:[%s2] sm:$0x1]
    %v70 = vlaneseq
    %v71 = vshrl.u32 %v70, 7
    %v72 = vsub.s32 0, %v71
    %v73 = vrot.slane %v68, %v72
    %v77 = vunpack.c.l.b16 %v66
    %v78 = vunpack.c.l.b16 %v67
    %v79 = vpack.c.b16 %v78, %v77
    %vm80 = vcmask 72704
    %v82 = vsel %vm80, %v65, 0
    %vm84 = vcmask 1043456
    %vm85 = vcmask 1044480
    %v86 = vsel %vm84, 4294967295, 65535
    %v87 = vsel %vm85, %v86, 0
    %v89 = vand.u32 %v79, %v87
    %91 = vmatprep.subr.bf16.mxu0 0
    %92 = vmatpush1.bf16.msra.mxu0 0
    %93 = vmatprep.subr.bf16.mxu0 0
    %94 = vmatpush1.bf16.msra.mxu0 0
    %95 = vmatprep.subr.bf16.mxu0 0
    %96 = vmatpush1.bf16.msra.mxu0 0
    %97 = vmatprep.subr.bf16.mxu0 0
    %98 = vmatpush1.bf16.msra.mxu0 0
    %99 = vmatprep.subr.bf16.mxu0 0
    %100 = vmatpush1.bf16.msra.mxu0 0
    %101 = vmatprep.subr.bf16.mxu0 0
    %102 = vmatpush1.bf16.msra.mxu0 0
    %103 = vmatprep.subr.bf16.mxu0 0
    %104 = vmatpush1.bf16.msra.mxu0 0
    %105 = vmatprep.subr.bf16.mxu0 0
    %106 = vmatpush1.bf16.msra.mxu0 %v89
    %107 = vmatprep.subr.bf16.mxu0 0
    %108 = vmatpush2.bf16.msra.mxu0 0
    %109 = vmatprep.subr.bf16.mxu0 0
    %110 = vmatpush2.bf16.msra.mxu0 0
    %111 = vmatprep.subr.bf16.mxu0 0
    %112 = vmatpush2.bf16.msra.mxu0 0
    %113 = vmatprep.subr.bf16.mxu0 0
    %114 = vmatpush2.bf16.msra.mxu0 0
    %115 = vmatprep.subr.bf16.mxu0 0
    %116 = vmatpush2.bf16.msra.mxu0 0
    %117 = vmatprep.subr.bf16.mxu0 0
    %118 = vmatpush2.bf16.msra.mxu0 0
    %119 = vmatprep.subr.bf16.mxu0 0
    %120 = vmatpush2.bf16.msra.mxu0 0
    %121 = vmatprep.subr.bf16.mxu0 0
    %122 = vmatpush2.bf16.msra.mxu0 0
    %123 = vmatprep.mubr.bf16.mxu0 0
    %124 = vmatmul.mubr.bf16.gmra.mxu0 %v82
    %v125 = vpop.f32.mrf.mxu0
    %v126 = vadd.f32 %v73, %v125
    %v127 = vpop.f32.mrf.mxu0
    %v128 = vpop.f32.mrf.mxu0
    %v129 = vadd.f32 %v73, %v128
    %v130 = vpop.f32.mrf.mxu0
    %131 = vdwg.mxu0
    %v132 = vmax.f32 %v126, 0.0
    %v133 = vmax.f32 %v129, 0.0
    %134 = vst.msk [vmem:[#allocation2 + $0x1] sm:$0xff] %vm56, %v132
    %135 = vst.msk [vmem:[#allocation2 + $0x11] sm:$0xff] %vm56, %v133
    %v136 = vld [vmem:[%s4] sm:$0x1]
    %v137 = vld [vmem:[#allocation2] ss:$2 sm:$0xf]
    %s138 = scalar_lea.vmem [#allocation2], 16
    %v139 = vld [vmem:[%s138] ss:$2 sm:$0xf]
    %v142 = vcombine.low %v137, %v139
    %v144 = vpack.c.bf16 %v142, %v142
    %v145 = vld [vmem:[%s3] sm:$0xf]
    %v147 = vsel %vm56, %v144, 0
    %v150 = vsel %vm84, %v145, 0
    %152 = vmatprep.subr.bf16.mxu0 0
    %153 = vmatpush1.bf16.msra.mxu0 0
    %154 = vmatprep.subr.bf16.mxu0 0
    %155 = vmatpush1.bf16.msra.mxu0 0
    %156 = vmatprep.subr.bf16.mxu0 0
    %157 = vmatpush1.bf16.msra.mxu0 0
    %158 = vmatprep.subr.bf16.mxu0 0
    %159 = vmatpush1.bf16.msra.mxu0 0
    %160 = vmatprep.subr.bf16.mxu0 0
    %161 = vmatpush1.bf16.msra.mxu0 0
    %162 = vmatprep.subr.bf16.mxu0 0
    %163 = vmatpush1.bf16.msra.mxu0 0
    %164 = vmatprep.subr.bf16.mxu0 0
    %165 = vmatpush1.bf16.msra.mxu0 0
    %166 = vmatprep.subr.bf16.mxu0 0
    %167 = vmatpush1.bf16.msra.mxu0 %v150
    %168 = vmatprep.subr.bf16.mxu0 0
    %169 = vmatpush2.bf16.msra.mxu0 0
    %170 = vmatprep.subr.bf16.mxu0 0
    %171 = vmatpush2.bf16.msra.mxu0 0
    %172 = vmatprep.subr.bf16.mxu0 0
    %173 = vmatpush2.bf16.msra.mxu0 0
    %174 = vmatprep.subr.bf16.mxu0 0
    %175 = vmatpush2.bf16.msra.mxu0 0
    %176 = vmatprep.subr.bf16.mxu0 0
    %177 = vmatpush2.bf16.msra.mxu0 0
    %178 = vmatprep.subr.bf16.mxu0 0
    %179 = vmatpush2.bf16.msra.mxu0 0
    %180 = vmatprep.subr.bf16.mxu0 0
    %181 = vmatpush2.bf16.msra.mxu0 0
    %182 = vmatprep.subr.bf16.mxu0 0
    %183 = vmatpush2.bf16.msra.mxu0 0
    %184 = vmatprep.mubr.bf16.mxu0 0
    %185 = vmatmul.mubr.bf16.gmra.mxu0 %v147
    %v186 = vpop.f32.mrf.mxu0
    %v187 = vadd.f32 0.0, %v186
    %v188 = vpop.f32.mrf.mxu0
    %v189 = vpop.f32.mrf.mxu0
    %v190 = vpop.f32.mrf.mxu0
    %191 = vdwg.mxu0
    %v193 = vlaneseq
    %v194 = vshrl.u32 %v193, 7
    %v195 = vsub.s32 0, %v194
    %v196 = vrot.slane %v136, %v195
    %v198 = vadd.f32 %v196, %v187
    %s199 = scalar_lea.vmem [#allocation2], 1
    %v200 = vld [vmem:[%s199] ss:$2 sm:$0xf]
    %s201 = scalar_lea.vmem [#allocation2], 17
    %v202 = vld [vmem:[%s201] ss:$2 sm:$0xf]
    %v205 = vcombine.low %v200, %v202
    %v207 = vpack.c.bf16 %v205, %v205
    %s208 = scalar_lea.vmem %s3, 4
    %v209 = vld [vmem:[%s208] sm:$0xf]
    %v211 = vsel %vm56, %v207, 0
    %v214 = vsel %vm84, %v209, 0
    %216 = vmatprep.subr.bf16.mxu0 0
    %217 = vmatpush1.bf16.msra.mxu0 0
    %218 = vmatprep.subr.bf16.mxu0 0
    %219 = vmatpush1.bf16.msra.mxu0 0
    %220 = vmatprep.subr.bf16.mxu0 0
    %221 = vmatpush1.bf16.msra.mxu0 0
    %222 = vmatprep.subr.bf16.mxu0 0
    %223 = vmatpush1.bf16.msra.mxu0 0
    %224 = vmatprep.subr.bf16.mxu0 0
    %225 = vmatpush1.bf16.msra.mxu0 0
    %226 = vmatprep.subr.bf16.mxu0 0
    %227 = vmatpush1.bf16.msra.mxu0 0
    %228 = vmatprep.subr.bf16.mxu0 0
    %229 = vmatpush1.bf16.msra.mxu0 0
    %230 = vmatprep.subr.bf16.mxu0 0
    %231 = vmatpush1.bf16.msra.mxu0 %v214
    %232 = vmatprep.subr.bf16.mxu0 0
    %233 = vmatpush2.bf16.msra.mxu0 0
    %234 = vmatprep.subr.bf16.mxu0 0
    %235 = vmatpush2.bf16.msra.mxu0 0
    %236 = vmatprep.subr.bf16.mxu0 0
    %237 = vmatpush2.bf16.msra.mxu0 0
    %238 = vmatprep.subr.bf16.mxu0 0
    %239 = vmatpush2.bf16.msra.mxu0 0
    %240 = vmatprep.subr.bf16.mxu0 0
    %241 = vmatpush2.bf16.msra.mxu0 0
    %242 = vmatprep.subr.bf16.mxu0 0
    %243 = vmatpush2.bf16.msra.mxu0 0
    %244 = vmatprep.subr.bf16.mxu0 0
    %245 = vmatpush2.bf16.msra.mxu0 0
    %246 = vmatprep.subr.bf16.mxu0 0
    %247 = vmatpush2.bf16.msra.mxu0 0
    %248 = vmatprep.mubr.bf16.mxu0 0
    %249 = vmatmul.mubr.bf16.gmra.mxu0 %v211
    %v250 = vpop.f32.mrf.mxu0
    %v251 = vadd.f32 0.0, %v250
    %v252 = vpop.f32.mrf.mxu0
    %v253 = vpop.f32.mrf.mxu0
    %v254 = vpop.f32.mrf.mxu0
    %255 = vdwg.mxu0
    %v256 = vadd.f32 %v198, %v251
    %s257 = scalar_lea.vmem [#allocation2], 2
    %v258 = vld [vmem:[%s257] ss:$2 sm:$0xf]
    %s259 = scalar_lea.vmem [#allocation2], 18
    %v260 = vld [vmem:[%s259] ss:$2 sm:$0xf]
    %v263 = vcombine.low %v258, %v260
    %v265 = vpack.c.bf16 %v263, %v263
    %s266 = scalar_lea.vmem %s3, 8
    %v267 = vld [vmem:[%s266] sm:$0xf]
    %v269 = vsel %vm56, %v265, 0
    %v272 = vsel %vm84, %v267, 0
    %274 = vmatprep.subr.bf16.mxu0 0
    %275 = vmatpush1.bf16.msra.mxu0 0
    %276 = vmatprep.subr.bf16.mxu0 0
    %277 = vmatpush1.bf16.msra.mxu0 0
    %278 = vmatprep.subr.bf16.mxu0 0
    %279 = vmatpush1.bf16.msra.mxu0 0
    %280 = vmatprep.subr.bf16.mxu0 0
    %281 = vmatpush1.bf16.msra.mxu0 0
    %282 = vmatprep.subr.bf16.mxu0 0
    %283 = vmatpush1.bf16.msra.mxu0 0
    %284 = vmatprep.subr.bf16.mxu0 0
    %285 = vmatpush1.bf16.msra.mxu0 0
    %286 = vmatprep.subr.bf16.mxu0 0
    %287 = vmatpush1.bf16.msra.mxu0 0
    %288 = vmatprep.subr.bf16.mxu0 0
    %289 = vmatpush1.bf16.msra.mxu0 %v272
    %290 = vmatprep.subr.bf16.mxu0 0
    %291 = vmatpush2.bf16.msra.mxu0 0
    %292 = vmatprep.subr.bf16.mxu0 0
    %293 = vmatpush2.bf16.msra.mxu0 0
    %294 = vmatprep.subr.bf16.mxu0 0
    %295 = vmatpush2.bf16.msra.mxu0 0
    %296 = vmatprep.subr.bf16.mxu0 0
    %297 = vmatpush2.bf16.msra.mxu0 0
    %298 = vmatprep.subr.bf16.mxu0 0
    %299 = vmatpush2.bf16.msra.mxu0 0
    %300 = vmatprep.subr.bf16.mxu0 0
    %301 = vmatpush2.bf16.msra.mxu0 0
    %302 = vmatprep.subr.bf16.mxu0 0
    %303 = vmatpush2.bf16.msra.mxu0 0
    %304 = vmatprep.subr.bf16.mxu0 0
    %305 = vmatpush2.bf16.msra.mxu0 0
    %306 = vmatprep.mubr.bf16.mxu0 0
    %307 = vmatmul.mubr.bf16.gmra.mxu0 %v269
    %v308 = vpop.f32.mrf.mxu0
    %v309 = vadd.f32 0.0, %v308
    %v310 = vpop.f32.mrf.mxu0
    %v311 = vpop.f32.mrf.mxu0
    %v312 = vpop.f32.mrf.mxu0
    %313 = vdwg.mxu0
    %v314 = vadd.f32 %v256, %v309
    %v315 = vmax.f32 %v314, 0.0
    %v317 = vcombine.high %v315, %v315
    %vm319 = vcmask 60416
    %320 = vst.msk [vmem:[#allocation3 + $0x1] sm:$0xf] %vm319, %v315
    %321 = vst.msk [vmem:[#allocation3 + $0x9] sm:$0xf] %vm319, %v317
    %v322 = vld [vmem:[%s6] sm:$0x1]
    %v323 = vld [vmem:[#allocation3] ss:$2 sm:$0x3]
    %s324 = scalar_lea.vmem [#allocation3], 8
    %v325 = vld [vmem:[%s324] ss:$2 sm:$0x3]
    %v328 = vcombine.low %v323, %v325
    %v330 = vunpack.c.l.s4 1983009808
    %v331 = vunpack.c.0.s8 %v330
    %v332 = vlaneseq
    %v333 = vshrl.u32 %v332, 7
    %v334 = vsub.s32 %v331, %v333
    %v335 = vrot.slane %v328, %v334
    %v337 = vpack.c.bf16 %v335, %v335
    %v338 = vld [vmem:[#allocation7] sm:$0xf]
    %v340 = vsel %vm56, %v337, 0
    %v343 = vsel %vm84, %v338, 0
    %345 = vmatprep.subr.bf16.mxu0 0
    %346 = vmatpush1.bf16.msra.mxu0 0
    %347 = vmatprep.subr.bf16.mxu0 0
    %348 = vmatpush1.bf16.msra.mxu0 0
    %349 = vmatprep.subr.bf16.mxu0 0
    %350 = vmatpush1.bf16.msra.mxu0 0
    %351 = vmatprep.subr.bf16.mxu0 0
    %352 = vmatpush1.bf16.msra.mxu0 0
    %353 = vmatprep.subr.bf16.mxu0 0
    %354 = vmatpush1.bf16.msra.mxu0 0
    %355 = vmatprep.subr.bf16.mxu0 0
    %356 = vmatpush1.bf16.msra.mxu0 0
    %357 = vmatprep.subr.bf16.mxu0 0
    %358 = vmatpush1.bf16.msra.mxu0 0
    %359 = vmatprep.subr.bf16.mxu0 0
    %360 = vmatpush1.bf16.msra.mxu0 %v343
    %361 = vmatprep.subr.bf16.mxu0 0
    %362 = vmatpush2.bf16.msra.mxu0 0
    %363 = vmatprep.subr.bf16.mxu0 0
    %364 = vmatpush2.bf16.msra.mxu0 0
    %365 = vmatprep.subr.bf16.mxu0 0
    %366 = vmatpush2.bf16.msra.mxu0 0
    %367 = vmatprep.subr.bf16.mxu0 0
    %368 = vmatpush2.bf16.msra.mxu0 0
    %369 = vmatprep.subr.bf16.mxu0 0
    %370 = vmatpush2.bf16.msra.mxu0 0
    %371 = vmatprep.subr.bf16.mxu0 0
    %372 = vmatpush2.bf16.msra.mxu0 0
    %373 = vmatprep.subr.bf16.mxu0 0
    %374 = vmatpush2.bf16.msra.mxu0 0
    %375 = vmatprep.subr.bf16.mxu0 0
    %376 = vmatpush2.bf16.msra.mxu0 0
    %377 = vmatprep.mubr.bf16.mxu0 0
    %378 = vmatmul.mubr.bf16.gmra.mxu0 %v340
    %v379 = vpop.f32.mrf.mxu0
    %v380 = vadd.f32 0.0, %v379
    %v381 = vpop.f32.mrf.mxu0
    %v382 = vpop.f32.mrf.mxu0
    %v383 = vpop.f32.mrf.mxu0
    %384 = vdwg.mxu0
    %v386 = vlaneseq
    %v387 = vshrl.u32 %v386, 7
    %v388 = vsub.s32 0, %v387
    %v389 = vrot.slane %v322, %v388
    %v391 = vadd.f32 %v389, %v380
    %s392 = scalar_lea.vmem [#allocation3], 1
    %v393 = vld [vmem:[%s392] ss:$2 sm:$0x3]
    %s394 = scalar_lea.vmem [#allocation3], 9
    %v395 = vld [vmem:[%s394] ss:$2 sm:$0x3]
    %v398 = vcombine.low %v393, %v395
    %v400 = vunpack.c.l.s4 1983009808
    %v401 = vunpack.c.0.s8 %v400
    %v402 = vlaneseq
    %v403 = vshrl.u32 %v402, 7
    %v404 = vsub.s32 %v401, %v403
    %v405 = vrot.slane %v398, %v404
    %v407 = vpack.c.bf16 %v405, %v405
    %s408 = scalar_lea.vmem [#allocation7], 4
    %v409 = vld [vmem:[%s408] sm:$0xf]
    %v411 = vsel %vm56, %v407, 0
    %v414 = vsel %vm84, %v409, 0
    %416 = vmatprep.subr.bf16.mxu0 0
    %417 = vmatpush1.bf16.msra.mxu0 0
    %418 = vmatprep.subr.bf16.mxu0 0
    %419 = vmatpush1.bf16.msra.mxu0 0
    %420 = vmatprep.subr.bf16.mxu0 0
    %421 = vmatpush1.bf16.msra.mxu0 0
    %422 = vmatprep.subr.bf16.mxu0 0
    %423 = vmatpush1.bf16.msra.mxu0 0
    %424 = vmatprep.subr.bf16.mxu0 0
    %425 = vmatpush1.bf16.msra.mxu0 0
    %426 = vmatprep.subr.bf16.mxu0 0
    %427 = vmatpush1.bf16.msra.mxu0 0
    %428 = vmatprep.subr.bf16.mxu0 0
    %429 = vmatpush1.bf16.msra.mxu0 0
    %430 = vmatprep.subr.bf16.mxu0 0
    %431 = vmatpush1.bf16.msra.mxu0 %v414
    %432 = vmatprep.subr.bf16.mxu0 0
    %433 = vmatpush2.bf16.msra.mxu0 0
    %434 = vmatprep.subr.bf16.mxu0 0
    %435 = vmatpush2.bf16.msra.mxu0 0
    %436 = vmatprep.subr.bf16.mxu0 0
    %437 = vmatpush2.bf16.msra.mxu0 0
    %438 = vmatprep.subr.bf16.mxu0 0
    %439 = vmatpush2.bf16.msra.mxu0 0
    %440 = vmatprep.subr.bf16.mxu0 0
    %441 = vmatpush2.bf16.msra.mxu0 0
    %442 = vmatprep.subr.bf16.mxu0 0
    %443 = vmatpush2.bf16.msra.mxu0 0
    %444 = vmatprep.subr.bf16.mxu0 0
    %445 = vmatpush2.bf16.msra.mxu0 0
    %446 = vmatprep.subr.bf16.mxu0 0
    %447 = vmatpush2.bf16.msra.mxu0 0
    %448 = vmatprep.mubr.bf16.mxu0 0
    %449 = vmatmul.mubr.bf16.gmra.mxu0 %v411
    %v450 = vpop.f32.mrf.mxu0
    %v451 = vadd.f32 0.0, %v450
    %v452 = vpop.f32.mrf.mxu0
    %v453 = vpop.f32.mrf.mxu0
    %v454 = vpop.f32.mrf.mxu0
    %455 = vdwg.mxu0
    %v456 = vadd.f32 %v391, %v451
    %s457 = scalar_lea.vmem [#allocation3], 2
    %v458 = vld [vmem:[%s457] ss:$2 sm:$0x3]
    %s459 = scalar_lea.vmem [#allocation3], 10
    %v460 = vld [vmem:[%s459] ss:$2 sm:$0x3]
    %v463 = vcombine.low %v458, %v460
    %v465 = vunpack.c.l.s4 1983009808
    %v466 = vunpack.c.0.s8 %v465
    %v467 = vlaneseq
    %v468 = vshrl.u32 %v467, 7
    %v469 = vsub.s32 %v466, %v468
    %v470 = vrot.slane %v463, %v469
    %v472 = vpack.c.bf16 %v470, %v470
    %s473 = scalar_lea.vmem [#allocation7], 8
    %v474 = vld [vmem:[%s473] sm:$0xf]
    %v476 = vsel %vm56, %v472, 0
    %v479 = vsel %vm84, %v474, 0
    %481 = vmatprep.subr.bf16.mxu0 0
    %482 = vmatpush1.bf16.msra.mxu0 0
    %483 = vmatprep.subr.bf16.mxu0 0
    %484 = vmatpush1.bf16.msra.mxu0 0
    %485 = vmatprep.subr.bf16.mxu0 0
    %486 = vmatpush1.bf16.msra.mxu0 0
    %487 = vmatprep.subr.bf16.mxu0 0
    %488 = vmatpush1.bf16.msra.mxu0 0
    %489 = vmatprep.subr.bf16.mxu0 0
    %490 = vmatpush1.bf16.msra.mxu0 0
    %491 = vmatprep.subr.bf16.mxu0 0
    %492 = vmatpush1.bf16.msra.mxu0 0
    %493 = vmatprep.subr.bf16.mxu0 0
    %494 = vmatpush1.bf16.msra.mxu0 0
    %495 = vmatprep.subr.bf16.mxu0 0
    %496 = vmatpush1.bf16.msra.mxu0 %v479
    %497 = vmatprep.subr.bf16.mxu0 0
    %498 = vmatpush2.bf16.msra.mxu0 0
    %499 = vmatprep.subr.bf16.mxu0 0
    %500 = vmatpush2.bf16.msra.mxu0 0
    %501 = vmatprep.subr.bf16.mxu0 0
    %502 = vmatpush2.bf16.msra.mxu0 0
    %503 = vmatprep.subr.bf16.mxu0 0
    %504 = vmatpush2.bf16.msra.mxu0 0
    %505 = vmatprep.subr.bf16.mxu0 0
    %506 = vmatpush2.bf16.msra.mxu0 0
    %507 = vmatprep.subr.bf16.mxu0 0
    %508 = vmatpush2.bf16.msra.mxu0 0
    %509 = vmatprep.subr.bf16.mxu0 0
    %510 = vmatpush2.bf16.msra.mxu0 0
    %511 = vmatprep.subr.bf16.mxu0 0
    %512 = vmatpush2.bf16.msra.mxu0 0
    %513 = vmatprep.mubr.bf16.mxu0 0
    %514 = vmatmul.mubr.bf16.gmra.mxu0 %v476
    %v515 = vpop.f32.mrf.mxu0
    %v516 = vadd.f32 0.0, %v515
    %v517 = vpop.f32.mrf.mxu0
    %v518 = vpop.f32.mrf.mxu0
    %v519 = vpop.f32.mrf.mxu0
    %520 = vdwg.mxu0
    %v521 = vadd.f32 %v456, %v516
    %v522 = vmax.f32 %v521, 0.0
    %v525 = vunpack.c.l.s4 1983009808
    %v526 = vunpack.c.0.s8 %v525
    %v527 = vlaneseq
    %v528 = vshrl.u32 %v527, 7
    %v529 = vsub.s32 %v526, %v528
    %v530 = vrot.slane %v522, %v529
    %v531 = vcombine.high %v530, %v530
    %vm534 = vcmask 123904
    %v535 = vsel %vm534, %v530, 0.0
    %v536 = vrot.slane %v535, 4
    %v537 = vadd.f32 %v535, %v536
    %v538 = vrot.slane %v537, 2
    %v539 = vadd.f32 %v537, %v538
    %v540 = vrot.slane %v539, 1
    %v541 = vadd.f32 %v539, %v540
    %v542 = vsel %vm534, %v531, 0.0
    %v543 = vrot.slane %v542, 4
    %v544 = vadd.f32 %v542, %v543
    %v545 = vrot.slane %v544, 2
    %v546 = vadd.f32 %v544, %v545
    %v547 = vrot.slane %v546, 1
    %v548 = vadd.f32 %v546, %v547
    %vm551 = vcmask 1041409
    %v552 = vsel %vm551, %v548, %v541
    %554 = vst.msk [vmem:[#allocation9] sm:$0x3] %vm534, %v552
    // Predicated region
    $region38: #{tpu_custom_call.1} parent=1 // pred_check
      _
    $region39: #{tpu_custom_call.1} parent=1 // pred_check_branch
      %556 = sbr.rel (0) target = $region41
    $region40: #{tpu_custom_call.1} parent=1 // pred_region
      %s558 = ssub.s32 32, 32
      %559 = vsyncadd [#allocation6], %s558
      %s561 = sshll.u32 [#allocation9], 4
      %s562 = int_to_ptr.vmem [resolvable:$true] %s561
      %564 = dma.vmem_to_hbm [thread:$0]  %s562, 32, %s7, [#allocation6]
    $region41: #{tpu_custom_call.1} parent=1 // pred_fallthru
      _
    // Predicated region
    $region42: #{tpu_custom_call.1} parent=1 // pred_check
      _
    $region43: #{tpu_custom_call.1} parent=1 // pred_check_branch
      %566 = sbr.rel (0) target = $region45
    $region44: #{tpu_custom_call.1} parent=1 // pred_region
      %567 = dma.done [#allocation6], 32
    $region45: #{tpu_custom_call.1} parent=1 // pred_fallthru
      _
    %568 = vsyncpa [#allocation5], 1
    %569 = vsyncpa [#allocation8], 1
    %570 = vsyncpa [#allocation6], 1

</llo_original>
